<compile_context>
chip_gen: v5e
topology: v5e:2x2
jax: 0.10.0
libtpu: 0.0.40
codegen_flags: <defaults>
</compile_context>

<pallas_src>
import jax
import jax.numpy as jnp
from jax.experimental import pallas as pl
from jax.experimental.pallas import tpu as pltpu

BN_EPS = 1e-5


def vae_kernel(
    x_ref, eps_ref,
    w1, g1, be1,
    w2, g2, be2,
    w3, g3, be3,          # fused fc31 || fc32
    w4, g4, be4,
    w5, g5, be5,
    w6, b6,
    recon_ref, lat_ref,
):
    x = x_ref[...]
    eps = eps_ref[...]
    nl = eps_ref.shape[1]

    def mm(h, w_ref):
        # bf16 operands, f32 accumulation on the MXU.
        return jnp.dot(h.astype(jnp.bfloat16), w_ref[...],
                       preferred_element_type=jnp.float32)

    def bn(h, gamma_ref, beta_ref):
        # One-pass training-mode BatchNorm1d folded into a single affine.
        mean = jnp.mean(h, axis=0, keepdims=True)
        msq = jnp.mean(h * h, axis=0, keepdims=True)
        var = msq - mean * mean
        s = gamma_ref[...] * jax.lax.rsqrt(var + BN_EPS)
        t = beta_ref[...] - mean * s
        return h * s + t

    # ---- encode ----  (pre-BN linear biases dropped: they cancel exactly in BN)
    h1 = jnp.maximum(bn(mm(x, w1), g1, be1), 0.0)
    h2 = jnp.maximum(bn(mm(h1, w2), g2, be2), 0.0)
    mlv = bn(mm(h2, w3), g3, be3)            # [B, 2*nl] = [mu | logvar]
    mu = mlv[:, :nl]
    logvar = mlv[:, nl:]

    # ---- reparameterize ----
    z = eps * jnp.exp(0.5 * logvar) + mu

    # ---- decode ----
    # fc4 has K = n_latent (= 2): VPU outer product, skip the MXU round-trip.
    w4f = w4[...]
    h4_pre = z[:, 0:1] * w4f[0:1, :]
    for j in range(1, nl):
        h4_pre = h4_pre + z[:, j:j + 1] * w4f[j:j + 1, :]
    h4 = jnp.maximum(bn(h4_pre, g4, be4), 0.0)
    h5 = jnp.maximum(bn(mm(h4, w5), g5, be5), 0.0)
    logits = mm(h5, w6) + b6[...]            # fc6 keeps its bias (no BN after it)

    recon_ref[...] = jax.nn.sigmoid(logits).astype(recon_ref.dtype)
    lat_ref[...] = jnp.concatenate([mlv, z], axis=1).astype(lat_ref.dtype)


def make_params(key, n_in=512, factor=0.25, n_latent=2):
    """Deterministic PyTorch-style init. Linear weights returned as [in, out].
    Biases are kept for all layers (state_dict parity / eval-mode BN), even
    though the kernel only consumes fc6's bias."""
    d1 = int(n_in * factor)        # 128
    d2 = int(n_in * factor ** 2)   # 32

    dims = [
        ("fc1", n_in, d1, True),
        ("fc2", d1, d2, True),
        ("fc31", d2, n_latent, True),
        ("fc32", d2, n_latent, True),
        ("fc4", n_latent, d2, True),
        ("fc5", d2, d1, True),
        ("fc6", d1, n_in, False),
    ]
    params = {}
    for name, fan_in, fan_out, has_bn in dims:
        key, kw, kb = jax.random.split(key, 3)
        bound = 1.0 / jnp.sqrt(fan_in)
        w = jax.random.uniform(kw, (fan_in, fan_out), jnp.float32, -bound, bound)
        b = jax.random.uniform(kb, (1, fan_out), jnp.float32, -bound, bound)
        params[name] = {"w": w, "b": b}
        if has_bn:
            params[name]["gamma"] = jnp.ones((1, fan_out), jnp.float32)
            params[name]["beta"] = jnp.zeros((1, fan_out), jnp.float32)
    return params, (n_in, d1, d2, n_latent)


def vae_forward(x, eps, params):
    B, n_in = x.shape
    n_latent = eps.shape[1]
    bf16 = jnp.bfloat16

    def bn_layer(name, w_dtype=bf16):
        p = params[name]
        return [p["w"].astype(w_dtype), p["gamma"], p["beta"]]

    # Fuse fc31 || fc32 on the host (weights, gamma, beta concat along out dim).
    w3 = jnp.concatenate([params["fc31"]["w"], params["fc32"]["w"]], axis=1).astype(bf16)
    g3 = jnp.concatenate([params["fc31"]["gamma"], params["fc32"]["gamma"]], axis=1)
    be3 = jnp.concatenate([params["fc31"]["beta"], params["fc32"]["beta"]], axis=1)

    flat_inputs = [x, eps]
    flat_inputs += bn_layer("fc1")
    flat_inputs += bn_layer("fc2")
    flat_inputs += [w3, g3, be3]
    flat_inputs += bn_layer("fc4", w_dtype=jnp.float32)   # fc4 stays on the VPU in f32
    flat_inputs += bn_layer("fc5")
    flat_inputs += [params["fc6"]["w"].astype(bf16), params["fc6"]["b"]]

    vmem_spec = pl.BlockSpec(memory_space=pltpu.MemorySpace.VMEM)

    out_shapes = (
        jax.ShapeDtypeStruct((B, n_in), jnp.float32),           # recon
        jax.ShapeDtypeStruct((B, 3 * n_latent), jnp.float32),   # [mu | logvar | z]
    )

    recon, lat = pl.pallas_call(
        vae_kernel,
        out_shape=out_shapes,
        in_specs=[vmem_spec] * len(flat_inputs),
        out_specs=(vmem_spec, vmem_spec),
        compiler_params=pltpu.CompilerParams(vmem_limit_bytes=8 << 20),
    )(*flat_inputs)

    mu = lat[:, :n_latent]
    logvar = lat[:, n_latent:2 * n_latent]
    z = lat[:, 2 * n_latent:]
    return recon, z, mu, logvar


def vae_forward_ref(x, eps, params):
    """Pure-JAX reference with PyTorch structure (biases, two-pass BN, separate
    fc31/fc32), matched to the kernel's precision choice: bf16 MXU operands with
    f32 accumulation for the big layers, f32 for fc4."""
    bf16 = jnp.bfloat16

    def lin(h, name, low_precision=True):
        p = params[name]
        if low_precision:
            y = jnp.dot(h.astype(bf16), p["w"].astype(bf16),
                        preferred_element_type=jnp.float32)
        else:
            y = h @ p["w"]
        return y + p["b"]

    def bn(h, name):
        mean = jnp.mean(h, axis=0, keepdims=True)
        var = jnp.mean((h - mean) ** 2, axis=0, keepdims=True)
        return ((h - mean) * jax.lax.rsqrt(var + BN_EPS)
                * params[name]["gamma"] + params[name]["beta"])

    h1 = jax.nn.relu(bn(lin(x, "fc1"), "fc1"))
    h2 = jax.nn.relu(bn(lin(h1, "fc2"), "fc2"))
    mu = bn(lin(h2, "fc31"), "fc31")
    logvar = bn(lin(h2, "fc32"), "fc32")
    z = eps * jnp.exp(0.5 * logvar) + mu
    h4 = jax.nn.relu(bn(lin(z, "fc4", low_precision=False), "fc4"))
    h5 = jax.nn.relu(bn(lin(h4, "fc5"), "fc5"))
    recon = jax.nn.sigmoid(lin(h5, "fc6"))
    return recon, z, mu, logvar


if __name__ == "__main__":
    key = jax.random.PRNGKey(0)
    kp, kx, ke = jax.random.split(key, 3)

    params, (n_in, d1, d2, n_latent) = make_params(kp, n_in=512, factor=0.25, n_latent=2)

    B = 8
    x = jax.random.normal(kx, (B, n_in), jnp.float32)
    # reparameterize() draws eps ~ N(0, I); generated deterministically here.
    eps = jax.random.normal(ke, (B, n_latent), jnp.float32)

    recon, z, mu, logvar = jax.block_until_ready(vae_forward(x, eps, params))

    r_recon, r_z, r_mu, r_logvar = vae_forward_ref(x, eps, params)
    for a, b in ((recon, r_recon), (z, r_z), (mu, r_mu), (logvar, r_logvar)):
        assert jnp.allclose(a, b, atol=2e-3, rtol=2e-3), "mismatch vs JAX reference"

    print("KERNEL_OK")
</pallas_src>

<mosaic_0001>
module attributes {stable_mosaic.version = 11 : i64} {
  func.func @vae_kernel(%arg0: memref<8x512xf32, #tpu.memory_space<vmem>>, %arg1: memref<8x2xf32, #tpu.memory_space<vmem>>, %arg2: memref<512x128xbf16, #tpu.memory_space<vmem>>, %arg3: memref<1x128xf32, #tpu.memory_space<vmem>>, %arg4: memref<1x128xf32, #tpu.memory_space<vmem>>, %arg5: memref<128x32xbf16, #tpu.memory_space<vmem>>, %arg6: memref<1x32xf32, #tpu.memory_space<vmem>>, %arg7: memref<1x32xf32, #tpu.memory_space<vmem>>, %arg8: memref<32x4xbf16, #tpu.memory_space<vmem>>, %arg9: memref<1x4xf32, #tpu.memory_space<vmem>>, %arg10: memref<1x4xf32, #tpu.memory_space<vmem>>, %arg11: memref<2x32xf32, #tpu.memory_space<vmem>>, %arg12: memref<1x32xf32, #tpu.memory_space<vmem>>, %arg13: memref<1x32xf32, #tpu.memory_space<vmem>>, %arg14: memref<32x128xbf16, #tpu.memory_space<vmem>>, %arg15: memref<1x128xf32, #tpu.memory_space<vmem>>, %arg16: memref<1x128xf32, #tpu.memory_space<vmem>>, %arg17: memref<128x512xbf16, #tpu.memory_space<vmem>>, %arg18: memref<1x512xf32, #tpu.memory_space<vmem>>, %arg19: memref<8x512xf32, #tpu.memory_space<vmem>>, %arg20: memref<8x6xf32, #tpu.memory_space<vmem>>) attributes {dimension_semantics = [], scalar_prefetch = 0 : i64, scratch_operands = 0 : i64, tpu.core_type = #tpu.core_type<tc>} {
    %c0 = arith.constant 0 : index
    %c0_0 = arith.constant 0 : index
    %0 = vector.load %arg0[%c0, %c0_0] : memref<8x512xf32, #tpu.memory_space<vmem>>, vector<8x512xf32>
    %c0_1 = arith.constant 0 : index
    %c0_2 = arith.constant 0 : index
    %1 = vector.load %arg1[%c0_1, %c0_2] : memref<8x2xf32, #tpu.memory_space<vmem>>, vector<8x2xf32>
    %2 = arith.truncf %0 : vector<8x512xf32> to vector<8x512xbf16>
    %c0_3 = arith.constant 0 : index
    %c0_4 = arith.constant 0 : index
    %3 = vector.load %arg2[%c0_3, %c0_4] : memref<512x128xbf16, #tpu.memory_space<vmem>>, vector<512x128xbf16>
    %cst = arith.constant dense<0.000000e+00> : vector<8x128xf32>
    %4 = tpu.matmul %2, %3, %cst {dimension_numbers = #tpu.dot_dimension_numbers<[1], [0], [0], [1], [0, 0, 1, 1], [], []>} : vector<8x512xbf16>, vector<512x128xbf16>, vector<8x128xf32> -> vector<8x128xf32>
    %cst_5 = arith.constant dense<0.000000e+00> : vector<128xf32>
    %5 = vector.multi_reduction <add>, %4, %cst_5 [0] : vector<8x128xf32> to vector<128xf32>
    %6 = vector.shape_cast %5 : vector<128xf32> to vector<1x128xf32>
    %cst_6 = arith.constant 8.000000e+00 : f32
    %7 = vector.broadcast %cst_6 : f32 to vector<1x128xf32>
    %8 = arith.divf %6, %7 : vector<1x128xf32>
    %9 = arith.mulf %4, %4 : vector<8x128xf32>
    %cst_7 = arith.constant dense<0.000000e+00> : vector<128xf32>
    %10 = vector.multi_reduction <add>, %9, %cst_7 [0] : vector<8x128xf32> to vector<128xf32>
    %11 = vector.shape_cast %10 : vector<128xf32> to vector<1x128xf32>
    %cst_8 = arith.constant 8.000000e+00 : f32
    %12 = vector.broadcast %cst_8 : f32 to vector<1x128xf32>
    %13 = arith.divf %11, %12 : vector<1x128xf32>
    %14 = arith.mulf %8, %8 : vector<1x128xf32>
    %15 = arith.subf %13, %14 : vector<1x128xf32>
    %c0_9 = arith.constant 0 : index
    %c0_10 = arith.constant 0 : index
    %16 = vector.load %arg3[%c0_9, %c0_10] : memref<1x128xf32, #tpu.memory_space<vmem>>, vector<1x128xf32>
    %cst_11 = arith.constant 9.99999974E-6 : f32
    %17 = vector.broadcast %cst_11 : f32 to vector<1x128xf32>
    %18 = arith.addf %15, %17 : vector<1x128xf32>
    %19 = math.rsqrt %18 : vector<1x128xf32>
    %20 = arith.mulf %16, %19 : vector<1x128xf32>
    %c0_12 = arith.constant 0 : index
    %c0_13 = arith.constant 0 : index
    %21 = vector.load %arg4[%c0_12, %c0_13] : memref<1x128xf32, #tpu.memory_space<vmem>>, vector<1x128xf32>
    %22 = arith.mulf %8, %20 : vector<1x128xf32>
    %23 = arith.subf %21, %22 : vector<1x128xf32>
    %24 = vector.broadcast %20 : vector<1x128xf32> to vector<8x128xf32>
    %25 = arith.mulf %4, %24 : vector<8x128xf32>
    %26 = vector.broadcast %23 : vector<1x128xf32> to vector<8x128xf32>
    %27 = arith.addf %25, %26 : vector<8x128xf32>
    %cst_14 = arith.constant 0.000000e+00 : f32
    %28 = vector.broadcast %cst_14 : f32 to vector<8x128xf32>
    %29 = arith.maximumf %27, %28 : vector<8x128xf32>
    %30 = arith.truncf %29 : vector<8x128xf32> to vector<8x128xbf16>
    %c0_15 = arith.constant 0 : index
    %c0_16 = arith.constant 0 : index
    %31 = vector.load %arg5[%c0_15, %c0_16] : memref<128x32xbf16, #tpu.memory_space<vmem>>, vector<128x32xbf16>
    %cst_17 = arith.constant dense<0.000000e+00> : vector<8x32xf32>
    %32 = tpu.matmul %30, %31, %cst_17 {dimension_numbers = #tpu.dot_dimension_numbers<[1], [0], [0], [1], [0, 0, 1, 1], [], []>} : vector<8x128xbf16>, vector<128x32xbf16>, vector<8x32xf32> -> vector<8x32xf32>
    %cst_18 = arith.constant dense<0.000000e+00> : vector<32xf32>
    %33 = vector.multi_reduction <add>, %32, %cst_18 [0] : vector<8x32xf32> to vector<32xf32>
    %34 = vector.shape_cast %33 : vector<32xf32> to vector<1x32xf32>
    %cst_19 = arith.constant 8.000000e+00 : f32
    %35 = vector.broadcast %cst_19 : f32 to vector<1x32xf32>
    %36 = arith.divf %34, %35 : vector<1x32xf32>
    %37 = arith.mulf %32, %32 : vector<8x32xf32>
    %cst_20 = arith.constant dense<0.000000e+00> : vector<32xf32>
    %38 = vector.multi_reduction <add>, %37, %cst_20 [0] : vector<8x32xf32> to vector<32xf32>
    %39 = vector.shape_cast %38 : vector<32xf32> to vector<1x32xf32>
    %cst_21 = arith.constant 8.000000e+00 : f32
    %40 = vector.broadcast %cst_21 : f32 to vector<1x32xf32>
    %41 = arith.divf %39, %40 : vector<1x32xf32>
    %42 = arith.mulf %36, %36 : vector<1x32xf32>
    %43 = arith.subf %41, %42 : vector<1x32xf32>
    %c0_22 = arith.constant 0 : index
    %c0_23 = arith.constant 0 : index
    %44 = vector.load %arg6[%c0_22, %c0_23] : memref<1x32xf32, #tpu.memory_space<vmem>>, vector<1x32xf32>
    %cst_24 = arith.constant 9.99999974E-6 : f32
    %45 = vector.broadcast %cst_24 : f32 to vector<1x32xf32>
    %46 = arith.addf %43, %45 : vector<1x32xf32>
    %47 = math.rsqrt %46 : vector<1x32xf32>
    %48 = arith.mulf %44, %47 : vector<1x32xf32>
    %c0_25 = arith.constant 0 : index
    %c0_26 = arith.constant 0 : index
    %49 = vector.load %arg7[%c0_25, %c0_26] : memref<1x32xf32, #tpu.memory_space<vmem>>, vector<1x32xf32>
    %50 = arith.mulf %36, %48 : vector<1x32xf32>
    %51 = arith.subf %49, %50 : vector<1x32xf32>
    %52 = vector.broadcast %48 : vector<1x32xf32> to vector<8x32xf32>
    %53 = arith.mulf %32, %52 : vector<8x32xf32>
    %54 = vector.broadcast %51 : vector<1x32xf32> to vector<8x32xf32>
    %55 = arith.addf %53, %54 : vector<8x32xf32>
    %cst_27 = arith.constant 0.000000e+00 : f32
    %56 = vector.broadcast %cst_27 : f32 to vector<8x32xf32>
    %57 = arith.maximumf %55, %56 : vector<8x32xf32>
    %58 = arith.truncf %57 : vector<8x32xf32> to vector<8x32xbf16>
    %c0_28 = arith.constant 0 : index
    %c0_29 = arith.constant 0 : index
    %59 = vector.load %arg8[%c0_28, %c0_29] : memref<32x4xbf16, #tpu.memory_space<vmem>>, vector<32x4xbf16>
    %cst_30 = arith.constant dense<0.000000e+00> : vector<8x4xf32>
    %60 = tpu.matmul %58, %59, %cst_30 {dimension_numbers = #tpu.dot_dimension_numbers<[1], [0], [0], [1], [0, 0, 1, 1], [], []>} : vector<8x32xbf16>, vector<32x4xbf16>, vector<8x4xf32> -> vector<8x4xf32>
    %cst_31 = arith.constant dense<0.000000e+00> : vector<4xf32>
    %61 = vector.multi_reduction <add>, %60, %cst_31 [0] : vector<8x4xf32> to vector<4xf32>
    %62 = vector.shape_cast %61 : vector<4xf32> to vector<1x4xf32>
    %cst_32 = arith.constant 8.000000e+00 : f32
    %63 = vector.broadcast %cst_32 : f32 to vector<1x4xf32>
    %64 = arith.divf %62, %63 : vector<1x4xf32>
    %65 = arith.mulf %60, %60 : vector<8x4xf32>
    %cst_33 = arith.constant dense<0.000000e+00> : vector<4xf32>
    %66 = vector.multi_reduction <add>, %65, %cst_33 [0] : vector<8x4xf32> to vector<4xf32>
    %67 = vector.shape_cast %66 : vector<4xf32> to vector<1x4xf32>
    %cst_34 = arith.constant 8.000000e+00 : f32
    %68 = vector.broadcast %cst_34 : f32 to vector<1x4xf32>
    %69 = arith.divf %67, %68 : vector<1x4xf32>
    %70 = arith.mulf %64, %64 : vector<1x4xf32>
    %71 = arith.subf %69, %70 : vector<1x4xf32>
    %c0_35 = arith.constant 0 : index
    %c0_36 = arith.constant 0 : index
    %72 = vector.load %arg9[%c0_35, %c0_36] : memref<1x4xf32, #tpu.memory_space<vmem>>, vector<1x4xf32>
    %cst_37 = arith.constant 9.99999974E-6 : f32
    %73 = vector.broadcast %cst_37 : f32 to vector<1x4xf32>
    %74 = arith.addf %71, %73 : vector<1x4xf32>
    %75 = math.rsqrt %74 : vector<1x4xf32>
    %76 = arith.mulf %72, %75 : vector<1x4xf32>
    %c0_38 = arith.constant 0 : index
    %c0_39 = arith.constant 0 : index
    %77 = vector.load %arg10[%c0_38, %c0_39] : memref<1x4xf32, #tpu.memory_space<vmem>>, vector<1x4xf32>
    %78 = arith.mulf %64, %76 : vector<1x4xf32>
    %79 = arith.subf %77, %78 : vector<1x4xf32>
    %80 = vector.broadcast %76 : vector<1x4xf32> to vector<8x4xf32>
    %81 = arith.mulf %60, %80 : vector<8x4xf32>
    %82 = vector.broadcast %79 : vector<1x4xf32> to vector<8x4xf32>
    %83 = arith.addf %81, %82 : vector<8x4xf32>
    %84 = vector.extract_strided_slice %83 {offsets = [0, 0], sizes = [8, 2], strides = [1, 1]} : vector<8x4xf32> to vector<8x2xf32>
    %85 = vector.extract_strided_slice %83 {offsets = [0, 2], sizes = [8, 2], strides = [1, 1]} : vector<8x4xf32> to vector<8x2xf32>
    %cst_40 = arith.constant 5.000000e-01 : f32
    %86 = vector.broadcast %cst_40 : f32 to vector<8x2xf32>
    %87 = arith.mulf %86, %85 : vector<8x2xf32>
    %88 = math.exp %87 : vector<8x2xf32>
    %89 = arith.mulf %1, %88 : vector<8x2xf32>
    %90 = arith.addf %89, %84 : vector<8x2xf32>
    %c0_41 = arith.constant 0 : index
    %c0_42 = arith.constant 0 : index
    %91 = vector.load %arg11[%c0_41, %c0_42] : memref<2x32xf32, #tpu.memory_space<vmem>>, vector<2x32xf32>
    %92 = vector.extract_strided_slice %90 {offsets = [0, 0], sizes = [8, 1], strides = [1, 1]} : vector<8x2xf32> to vector<8x1xf32>
    %93 = vector.extract_strided_slice %91 {offsets = [0, 0], sizes = [1, 32], strides = [1, 1]} : vector<2x32xf32> to vector<1x32xf32>
    %94 = vector.broadcast %92 : vector<8x1xf32> to vector<8x32xf32>
    %95 = vector.broadcast %93 : vector<1x32xf32> to vector<8x32xf32>
    %96 = arith.mulf %94, %95 : vector<8x32xf32>
    %97 = vector.extract_strided_slice %90 {offsets = [0, 1], sizes = [8, 1], strides = [1, 1]} : vector<8x2xf32> to vector<8x1xf32>
    %98 = vector.extract_strided_slice %91 {offsets = [1, 0], sizes = [1, 32], strides = [1, 1]} : vector<2x32xf32> to vector<1x32xf32>
    %99 = vector.broadcast %97 : vector<8x1xf32> to vector<8x32xf32>
    %100 = vector.broadcast %98 : vector<1x32xf32> to vector<8x32xf32>
    %101 = arith.mulf %99, %100 : vector<8x32xf32>
    %102 = arith.addf %96, %101 : vector<8x32xf32>
    %cst_43 = arith.constant dense<0.000000e+00> : vector<32xf32>
    %103 = vector.multi_reduction <add>, %102, %cst_43 [0] : vector<8x32xf32> to vector<32xf32>
    %104 = vector.shape_cast %103 : vector<32xf32> to vector<1x32xf32>
    %cst_44 = arith.constant 8.000000e+00 : f32
    %105 = vector.broadcast %cst_44 : f32 to vector<1x32xf32>
    %106 = arith.divf %104, %105 : vector<1x32xf32>
    %107 = arith.mulf %102, %102 : vector<8x32xf32>
    %cst_45 = arith.constant dense<0.000000e+00> : vector<32xf32>
    %108 = vector.multi_reduction <add>, %107, %cst_45 [0] : vector<8x32xf32> to vector<32xf32>
    %109 = vector.shape_cast %108 : vector<32xf32> to vector<1x32xf32>
    %cst_46 = arith.constant 8.000000e+00 : f32
    %110 = vector.broadcast %cst_46 : f32 to vector<1x32xf32>
    %111 = arith.divf %109, %110 : vector<1x32xf32>
    %112 = arith.mulf %106, %106 : vector<1x32xf32>
    %113 = arith.subf %111, %112 : vector<1x32xf32>
    %c0_47 = arith.constant 0 : index
    %c0_48 = arith.constant 0 : index
    %114 = vector.load %arg12[%c0_47, %c0_48] : memref<1x32xf32, #tpu.memory_space<vmem>>, vector<1x32xf32>
    %cst_49 = arith.constant 9.99999974E-6 : f32
    %115 = vector.broadcast %cst_49 : f32 to vector<1x32xf32>
    %116 = arith.addf %113, %115 : vector<1x32xf32>
    %117 = math.rsqrt %116 : vector<1x32xf32>
    %118 = arith.mulf %114, %117 : vector<1x32xf32>
    %c0_50 = arith.constant 0 : index
    %c0_51 = arith.constant 0 : index
    %119 = vector.load %arg13[%c0_50, %c0_51] : memref<1x32xf32, #tpu.memory_space<vmem>>, vector<1x32xf32>
    %120 = arith.mulf %106, %118 : vector<1x32xf32>
    %121 = arith.subf %119, %120 : vector<1x32xf32>
    %122 = vector.broadcast %118 : vector<1x32xf32> to vector<8x32xf32>
    %123 = arith.mulf %102, %122 : vector<8x32xf32>
    %124 = vector.broadcast %121 : vector<1x32xf32> to vector<8x32xf32>
    %125 = arith.addf %123, %124 : vector<8x32xf32>
    %cst_52 = arith.constant 0.000000e+00 : f32
    %126 = vector.broadcast %cst_52 : f32 to vector<8x32xf32>
    %127 = arith.maximumf %125, %126 : vector<8x32xf32>
    %128 = arith.truncf %127 : vector<8x32xf32> to vector<8x32xbf16>
    %c0_53 = arith.constant 0 : index
    %c0_54 = arith.constant 0 : index
    %129 = vector.load %arg14[%c0_53, %c0_54] : memref<32x128xbf16, #tpu.memory_space<vmem>>, vector<32x128xbf16>
    %cst_55 = arith.constant dense<0.000000e+00> : vector<8x128xf32>
    %130 = tpu.matmul %128, %129, %cst_55 {dimension_numbers = #tpu.dot_dimension_numbers<[1], [0], [0], [1], [0, 0, 1, 1], [], []>} : vector<8x32xbf16>, vector<32x128xbf16>, vector<8x128xf32> -> vector<8x128xf32>
    %cst_56 = arith.constant dense<0.000000e+00> : vector<128xf32>
    %131 = vector.multi_reduction <add>, %130, %cst_56 [0] : vector<8x128xf32> to vector<128xf32>
    %132 = vector.shape_cast %131 : vector<128xf32> to vector<1x128xf32>
    %cst_57 = arith.constant 8.000000e+00 : f32
    %133 = vector.broadcast %cst_57 : f32 to vector<1x128xf32>
    %134 = arith.divf %132, %133 : vector<1x128xf32>
    %135 = arith.mulf %130, %130 : vector<8x128xf32>
    %cst_58 = arith.constant dense<0.000000e+00> : vector<128xf32>
    %136 = vector.multi_reduction <add>, %135, %cst_58 [0] : vector<8x128xf32> to vector<128xf32>
    %137 = vector.shape_cast %136 : vector<128xf32> to vector<1x128xf32>
    %cst_59 = arith.constant 8.000000e+00 : f32
    %138 = vector.broadcast %cst_59 : f32 to vector<1x128xf32>
    %139 = arith.divf %137, %138 : vector<1x128xf32>
    %140 = arith.mulf %134, %134 : vector<1x128xf32>
    %141 = arith.subf %139, %140 : vector<1x128xf32>
    %c0_60 = arith.constant 0 : index
    %c0_61 = arith.constant 0 : index
    %142 = vector.load %arg15[%c0_60, %c0_61] : memref<1x128xf32, #tpu.memory_space<vmem>>, vector<1x128xf32>
    %cst_62 = arith.constant 9.99999974E-6 : f32
    %143 = vector.broadcast %cst_62 : f32 to vector<1x128xf32>
    %144 = arith.addf %141, %143 : vector<1x128xf32>
    %145 = math.rsqrt %144 : vector<1x128xf32>
    %146 = arith.mulf %142, %145 : vector<1x128xf32>
    %c0_63 = arith.constant 0 : index
    %c0_64 = arith.constant 0 : index
    %147 = vector.load %arg16[%c0_63, %c0_64] : memref<1x128xf32, #tpu.memory_space<vmem>>, vector<1x128xf32>
    %148 = arith.mulf %134, %146 : vector<1x128xf32>
    %149 = arith.subf %147, %148 : vector<1x128xf32>
    %150 = vector.broadcast %146 : vector<1x128xf32> to vector<8x128xf32>
    %151 = arith.mulf %130, %150 : vector<8x128xf32>
    %152 = vector.broadcast %149 : vector<1x128xf32> to vector<8x128xf32>
    %153 = arith.addf %151, %152 : vector<8x128xf32>
    %cst_65 = arith.constant 0.000000e+00 : f32
    %154 = vector.broadcast %cst_65 : f32 to vector<8x128xf32>
    %155 = arith.maximumf %153, %154 : vector<8x128xf32>
    %156 = arith.truncf %155 : vector<8x128xf32> to vector<8x128xbf16>
    %c0_66 = arith.constant 0 : index
    %c0_67 = arith.constant 0 : index
    %157 = vector.load %arg17[%c0_66, %c0_67] : memref<128x512xbf16, #tpu.memory_space<vmem>>, vector<128x512xbf16>
    %cst_68 = arith.constant dense<0.000000e+00> : vector<8x512xf32>
    %158 = tpu.matmul %156, %157, %cst_68 {dimension_numbers = #tpu.dot_dimension_numbers<[1], [0], [0], [1], [0, 0, 1, 1], [], []>} : vector<8x128xbf16>, vector<128x512xbf16>, vector<8x512xf32> -> vector<8x512xf32>
    %c0_69 = arith.constant 0 : index
    %c0_70 = arith.constant 0 : index
    %159 = vector.load %arg18[%c0_69, %c0_70] : memref<1x512xf32, #tpu.memory_space<vmem>>, vector<1x512xf32>
    %160 = vector.broadcast %159 : vector<1x512xf32> to vector<8x512xf32>
    %161 = arith.addf %158, %160 : vector<8x512xf32>
    %162 = arith.negf %161 : vector<8x512xf32>
    %163 = math.exp %162 : vector<8x512xf32>
    %cst_71 = arith.constant 1.000000e+00 : f32
    %164 = vector.broadcast %cst_71 : f32 to vector<8x512xf32>
    %165 = arith.addf %164, %163 : vector<8x512xf32>
    %166 = arith.divf %164, %165 : vector<8x512xf32>
    %c0_72 = arith.constant 0 : index
    %c0_73 = arith.constant 0 : index
    %167 = vector.load %arg19[%c0_72, %c0_73] : memref<8x512xf32, #tpu.memory_space<vmem>>, vector<8x512xf32>
    tpu.vector_store %arg19[%c0_72, %c0_73], %166 {strides = array<i32>} : memref<8x512xf32, #tpu.memory_space<vmem>>, vector<8x512xf32>,
    %168 = tpu.concatenate %83, %90 in 1 : vector<8x4xf32>, vector<8x2xf32> -> vector<8x6xf32>
    %c0_74 = arith.constant 0 : index
    %c0_75 = arith.constant 0 : index
    %169 = vector.load %arg20[%c0_74, %c0_75] : memref<8x6xf32, #tpu.memory_space<vmem>>, vector<8x6xf32>
    tpu.vector_store %arg20[%c0_74, %c0_75], %168 {strides = array<i32>} : memref<8x6xf32, #tpu.memory_space<vmem>>, vector<8x6xf32>,
    return
  }
}

</mosaic_0001>

<llo_original>
// kernel: tpu_custom_call.1
$region0: #{tpu_custom_call.1}
  #allocation0 [shape = 'u32[]', space=smem, size = 0x4, offset = 0x4, fixed_abs, tag = 'smem constant byte address 0x4 - core index']
  #allocation1 [shape = 'u32[72,128]{1,0:T(1,128)}', space=vmem, size = 0x9000, scoped, tag = 'internal scratch']
  %s0 = inlined_call_operand.vmem [shape: f32[8,512], index: 0, kind: input, shape index: {}]
  %s1 = inlined_call_operand.vmem [shape: f32[8,2], index: 1, kind: input, shape index: {}]
  %s2 = inlined_call_operand.hbm [shape: bf16[512,128], index: 2, kind: input, shape index: {}]
  %s3 = inlined_call_operand.vmem [shape: f32[1,128], index: 3, kind: input, shape index: {}]
  %s4 = inlined_call_operand.vmem [shape: f32[1,128], index: 4, kind: input, shape index: {}]
  %s5 = inlined_call_operand.vmem [shape: bf16[128,32], index: 5, kind: input, shape index: {}]
  %s6 = inlined_call_operand.vmem [shape: f32[1,32], index: 6, kind: input, shape index: {}]
  %s7 = inlined_call_operand.vmem [shape: f32[1,32], index: 7, kind: input, shape index: {}]
  %s8 = inlined_call_operand.vmem [shape: bf16[32,4], index: 8, kind: input, shape index: {}]
  %s9 = inlined_call_operand.vmem [shape: f32[1,4], index: 9, kind: input, shape index: {}]
  %s10 = inlined_call_operand.vmem [shape: f32[1,4], index: 10, kind: input, shape index: {}]
  %s11 = inlined_call_operand.vmem [shape: f32[2,32], index: 11, kind: input, shape index: {}]
  %s12 = inlined_call_operand.vmem [shape: f32[1,32], index: 12, kind: input, shape index: {}]
  %s13 = inlined_call_operand.vmem [shape: f32[1,32], index: 13, kind: input, shape index: {}]
  %s14 = inlined_call_operand.vmem [shape: bf16[32,128], index: 14, kind: input, shape index: {}]
  %s15 = inlined_call_operand.vmem [shape: f32[1,128], index: 15, kind: input, shape index: {}]
  %s16 = inlined_call_operand.vmem [shape: f32[1,128], index: 16, kind: input, shape index: {}]
  %s17 = inlined_call_operand.hbm [shape: bf16[128,512], index: 17, kind: input, shape index: {}]
  %s18 = inlined_call_operand.vmem [shape: f32[1,512], index: 18, kind: input, shape index: {}]
  %s19 = inlined_call_operand.hbm [shape: f32[8,512], index: 19, kind: output, shape index: {0}]
  %s20 = inlined_call_operand.hbm [shape: f32[8,6], index: 20, kind: output, shape index: {1}]
  %21 = xla_tuple %s19, %s20
  %s22 = sld [smem:[#allocation0]]
  $region102: #{tpu_custom_call.1} parent=0
    _
  %s24 = ssub.s32 1, %s22
  %s25 = scalar_select 0, %s24, %s22
  $region1: #{tpu_custom_call.1} parent=0
    #allocation2 [shape = 'u8[131072]{0}', space=vmem, size = 0x20000, scoped, tag = 'input window, operand 2, single buffered']
    #allocation3 [shape = 's32[1]{0}', space=sflag, size = 0x4, scoped, tag = 'scoped memory for tpu_custom_call.1']
    #allocation4 [shape = 's32[1]{0}', space=sflag, size = 0x4, scoped, tag = 'scoped memory for tpu_custom_call.1']
    #allocation5 [shape = 'u8[131072]{0}', space=vmem, size = 0x20000, scoped, tag = 'input window, operand 17, single buffered']
    #allocation6 [shape = 's32[1]{0}', space=sflag, size = 0x4, scoped, tag = 'scoped memory for tpu_custom_call.1']
    #allocation7 [shape = 'u8[16384]{0}', space=vmem, size = 0x4000, scoped, tag = 'output window, operand 0, single buffered']
    #allocation8 [shape = 'u8[4096]{0}', space=vmem, size = 0x1000, scoped, tag = 'output window, operand 1, single buffered']
    #allocation9 [shape = 's32[1]{0}', space=sflag, size = 0x4, scoped, tag = 'scoped memory for tpu_custom_call.1']
    %26 = vsyncpa [#allocation3], 0
    %27 = vsyncpa [#allocation6], 0
    %28 = vsyncpa [#allocation4], 0
    %29 = vsyncpa [#allocation9], 0
    // Predicated region
    $region2: #{tpu_custom_call.1} parent=1 // pred_check
      _
    $region3: #{tpu_custom_call.1} parent=1 // pred_check_branch
      %31 = sbr.rel (0) target = $region5
    $region4: #{tpu_custom_call.1} parent=1 // pred_region
      _
    $region5: #{tpu_custom_call.1} parent=1 // pred_fallthru
      _
    // Predicated region
    $region6: #{tpu_custom_call.1} parent=1 // pred_check
      _
    $region7: #{tpu_custom_call.1} parent=1 // pred_check_branch
      %33 = sbr.rel (0) target = $region9
    $region8: #{tpu_custom_call.1} parent=1 // pred_region
      _
    $region9: #{tpu_custom_call.1} parent=1 // pred_fallthru
      _
    // Predicated region
    $region10: #{tpu_custom_call.1} parent=1 // pred_check
      _
    $region11: #{tpu_custom_call.1} parent=1 // pred_check_branch
      %35 = sbr.rel (0) target = $region13
    $region12: #{tpu_custom_call.1} parent=1 // pred_region
      %37 = vsyncadd [#allocation3], 0
      %s38 = sshll.u32 %s2, 4
      %s39 = int_to_ptr.hbm [resolvable:$true] %s38
      %s40 = sshll.u32 [#allocation2], 4
      %s41 = int_to_ptr.vmem [resolvable:$true] %s40
      %46 = dma.hbm_to_vmem [thread:$0]  %s39, 4096, %s41, [#allocation3], 64, 64, 4
    $region13: #{tpu_custom_call.1} parent=1 // pred_fallthru
      _
    // Predicated region
    $region14: #{tpu_custom_call.1} parent=1 // pred_check
      _
    $region15: #{tpu_custom_call.1} parent=1 // pred_check_branch
      %48 = sbr.rel (0) target = $region17
    $region16: #{tpu_custom_call.1} parent=1 // pred_region
      _
    $region17: #{tpu_custom_call.1} parent=1 // pred_fallthru
      _
    // Predicated region
    $region18: #{tpu_custom_call.1} parent=1 // pred_check
      _
    $region19: #{tpu_custom_call.1} parent=1 // pred_check_branch
      %50 = sbr.rel (0) target = $region21
    $region20: #{tpu_custom_call.1} parent=1 // pred_region
      _
    $region21: #{tpu_custom_call.1} parent=1 // pred_fallthru
      _
    // Predicated region
    $region22: #{tpu_custom_call.1} parent=1 // pred_check
      _
    $region23: #{tpu_custom_call.1} parent=1 // pred_check_branch
      %52 = sbr.rel (0) target = $region25
    $region24: #{tpu_custom_call.1} parent=1 // pred_region
      _
    $region25: #{tpu_custom_call.1} parent=1 // pred_fallthru
      _
    // Predicated region
    $region26: #{tpu_custom_call.1} parent=1 // pred_check
      _
    $region27: #{tpu_custom_call.1} parent=1 // pred_check_branch
      %54 = sbr.rel (0) target = $region29
    $region28: #{tpu_custom_call.1} parent=1 // pred_region
      _
    $region29: #{tpu_custom_call.1} parent=1 // pred_fallthru
      _
    // Predicated region
    $region30: #{tpu_custom_call.1} parent=1 // pred_check
      _
    $region31: #{tpu_custom_call.1} parent=1 // pred_check_branch
      %56 = sbr.rel (0) target = $region33
    $region32: #{tpu_custom_call.1} parent=1 // pred_region
      _
    $region33: #{tpu_custom_call.1} parent=1 // pred_fallthru
      _
    // Predicated region
    $region34: #{tpu_custom_call.1} parent=1 // pred_check
      _
    $region35: #{tpu_custom_call.1} parent=1 // pred_check_branch
      %58 = sbr.rel (0) target = $region37
    $region36: #{tpu_custom_call.1} parent=1 // pred_region
      _
    $region37: #{tpu_custom_call.1} parent=1 // pred_fallthru
      _
    // Predicated region
    $region38: #{tpu_custom_call.1} parent=1 // pred_check
      _
    $region39: #{tpu_custom_call.1} parent=1 // pred_check_branch
      %60 = sbr.rel (0) target = $region41
    $region40: #{tpu_custom_call.1} parent=1 // pred_region
      _
    $region41: #{tpu_custom_call.1} parent=1 // pred_fallthru
      _
    // Predicated region
    $region42: #{tpu_custom_call.1} parent=1 // pred_check
      _
    $region43: #{tpu_custom_call.1} parent=1 // pred_check_branch
      %62 = sbr.rel (0) target = $region45
    $region44: #{tpu_custom_call.1} parent=1 // pred_region
      _
    $region45: #{tpu_custom_call.1} parent=1 // pred_fallthru
      _
    // Predicated region
    $region46: #{tpu_custom_call.1} parent=1 // pred_check
      _
    $region47: #{tpu_custom_call.1} parent=1 // pred_check_branch
      %64 = sbr.rel (0) target = $region49
    $region48: #{tpu_custom_call.1} parent=1 // pred_region
      _
    $region49: #{tpu_custom_call.1} parent=1 // pred_fallthru
      _
    // Predicated region
    $region50: #{tpu_custom_call.1} parent=1 // pred_check
      _
    $region51: #{tpu_custom_call.1} parent=1 // pred_check_branch
      %66 = sbr.rel (0) target = $region53
    $region52: #{tpu_custom_call.1} parent=1 // pred_region
      _
    $region53: #{tpu_custom_call.1} parent=1 // pred_fallthru
      _
    // Predicated region
    $region54: #{tpu_custom_call.1} parent=1 // pred_check
      _
    $region55: #{tpu_custom_call.1} parent=1 // pred_check_branch
      %68 = sbr.rel (0) target = $region57
    $region56: #{tpu_custom_call.1} parent=1 // pred_region
      _
    $region57: #{tpu_custom_call.1} parent=1 // pred_fallthru
      _
    // Predicated region
    $region58: #{tpu_custom_call.1} parent=1 // pred_check
      _
    $region59: #{tpu_custom_call.1} parent=1 // pred_check_branch
      %70 = sbr.rel (0) target = $region61
    $region60: #{tpu_custom_call.1} parent=1 // pred_region
      _
    $region61: #{tpu_custom_call.1} parent=1 // pred_fallthru
      _
    // Predicated region
    $region62: #{tpu_custom_call.1} parent=1 // pred_check
      _
    $region63: #{tpu_custom_call.1} parent=1 // pred_check_branch
      %72 = sbr.rel (0) target = $region65
    $region64: #{tpu_custom_call.1} parent=1 // pred_region
      _
    $region65: #{tpu_custom_call.1} parent=1 // pred_fallthru
      _
    // Predicated region
    $region66: #{tpu_custom_call.1} parent=1 // pred_check
      _
    $region67: #{tpu_custom_call.1} parent=1 // pred_check_branch
      %74 = sbr.rel (0) target = $region69
    $region68: #{tpu_custom_call.1} parent=1 // pred_region
      _
    $region69: #{tpu_custom_call.1} parent=1 // pred_fallthru
      _
    // Predicated region
    $region70: #{tpu_custom_call.1} parent=1 // pred_check
      _
    $region71: #{tpu_custom_call.1} parent=1 // pred_check_branch
      %76 = sbr.rel (0) target = $region73
    $region72: #{tpu_custom_call.1} parent=1 // pred_region
      %78 = vsyncadd [#allocation6], 0
      %s79 = sshll.u32 %s17, 4
      %s80 = int_to_ptr.hbm [resolvable:$true] %s79
      %s81 = sshll.u32 [#allocation5], 4
      %s82 = int_to_ptr.vmem [resolvable:$true] %s81
      %87 = dma.hbm_to_vmem [thread:$0]  %s80, 4096, %s82, [#allocation6], 256, 256, 16
    $region73: #{tpu_custom_call.1} parent=1 // pred_fallthru
      _
    // Predicated region
    $region74: #{tpu_custom_call.1} parent=1 // pred_check
      _
    $region75: #{tpu_custom_call.1} parent=1 // pred_check_branch
      %89 = sbr.rel (0) target = $region77
    $region76: #{tpu_custom_call.1} parent=1 // pred_region
      _
    $region77: #{tpu_custom_call.1} parent=1 // pred_fallthru
      _
    // Predicated region
    $region78: #{tpu_custom_call.1} parent=1 // pred_check
      _
    $region79: #{tpu_custom_call.1} parent=1 // pred_check_branch
      %91 = sbr.rel (0) target = $region81
    $region80: #{tpu_custom_call.1} parent=1 // pred_region
      %93 = dma.done [#allocation3], 4096
    $region81: #{tpu_custom_call.1} parent=1 // pred_fallthru
      _
    // Predicated region
    $region82: #{tpu_custom_call.1} parent=1 // pred_check
      _
    $region83: #{tpu_custom_call.1} parent=1 // pred_check_branch
      %95 = sbr.rel (0) target = $region85
    $region84: #{tpu_custom_call.1} parent=1 // pred_region
      %97 = dma.done [#allocation6], 4096
    $region85: #{tpu_custom_call.1} parent=1 // pred_fallthru
      _
    %v99 = vld [vmem:[%s0] sm:$0xff]
    %v100 = vld [vmem:[%s0 + $0x8] sm:$0xff]
    %v101 = vld [vmem:[%s0 + $0x10] sm:$0xff]
    %v102 = vld [vmem:[%s0 + $0x18] sm:$0xff]
    %v103 = vld [vmem:[%s1] sm:$0xff]
    %v104 = vpack.c.bf16 %v99, %v99
    %v105 = vpack.c.bf16 %v100, %v100
    %v106 = vpack.c.bf16 %v101, %v101
    %v107 = vpack.c.bf16 %v102, %v102
    %v108 = vld [vmem:[#allocation2] sm:$0xf]
    %v109 = vld [vmem:[#allocation2 + $0x4] sm:$0xf]
    %v110 = vld [vmem:[#allocation2 + $0x8] sm:$0xf]
    %v111 = vld [vmem:[#allocation2 + $0xc] sm:$0xf]
    %v112 = vld [vmem:[#allocation2 + $0x10] sm:$0xf]
    %v113 = vld [vmem:[#allocation2 + $0x14] sm:$0xf]
    %v114 = vld [vmem:[#allocation2 + $0x18] sm:$0xf]
    %v115 = vld [vmem:[#allocation2 + $0x1c] sm:$0xf]
    %v116 = vld [vmem:[#allocation2 + $0x20] sm:$0xf]
    %v117 = vld [vmem:[#allocation2 + $0x24] sm:$0xf]
    %v118 = vld [vmem:[#allocation2 + $0x28] sm:$0xf]
    %v119 = vld [vmem:[#allocation2 + $0x2c] sm:$0xf]
    %v120 = vld [vmem:[#allocation2 + $0x30] sm:$0xf]
    %v121 = vld [vmem:[#allocation2 + $0x34] sm:$0xf]
    %v122 = vld [vmem:[#allocation2 + $0x38] sm:$0xf]
    %v123 = vld [vmem:[#allocation2 + $0x3c] sm:$0xf]
    %v124 = vld [vmem:[#allocation2 + $0x40] sm:$0xf]
    %v125 = vld [vmem:[#allocation2 + $0x44] sm:$0xf]
    %v126 = vld [vmem:[#allocation2 + $0x48] sm:$0xf]
    %v127 = vld [vmem:[#allocation2 + $0x4c] sm:$0xf]
    %v128 = vld [vmem:[#allocation2 + $0x50] sm:$0xf]
    %v129 = vld [vmem:[#allocation2 + $0x54] sm:$0xf]
    %v130 = vld [vmem:[#allocation2 + $0x58] sm:$0xf]
    %v131 = vld [vmem:[#allocation2 + $0x5c] sm:$0xf]
    %v132 = vld [vmem:[#allocation2 + $0x60] sm:$0xf]
    %v133 = vld [vmem:[#allocation2 + $0x64] sm:$0xf]
    %v134 = vld [vmem:[#allocation2 + $0x68] sm:$0xf]
    %v135 = vld [vmem:[#allocation2 + $0x6c] sm:$0xf]
    %v136 = vld [vmem:[#allocation2 + $0x70] sm:$0xf]
    %v137 = vld [vmem:[#allocation2 + $0x74] sm:$0xf]
    %v138 = vld [vmem:[#allocation2 + $0x78] sm:$0xf]
    %v139 = vld [vmem:[#allocation2 + $0x7c] sm:$0xf]
    %v140 = vld [vmem:[#allocation2 + $0x80] sm:$0xf]
    %v141 = vld [vmem:[#allocation2 + $0x84] sm:$0xf]
    %v142 = vld [vmem:[#allocation2 + $0x88] sm:$0xf]
    %v143 = vld [vmem:[#allocation2 + $0x8c] sm:$0xf]
    %v144 = vld [vmem:[#allocation2 + $0x90] sm:$0xf]
    %v145 = vld [vmem:[#allocation2 + $0x94] sm:$0xf]
    %v146 = vld [vmem:[#allocation2 + $0x98] sm:$0xf]
    %v147 = vld [vmem:[#allocation2 + $0x9c] sm:$0xf]
    %v148 = vld [vmem:[#allocation2 + $0xa0] sm:$0xf]
    %v149 = vld [vmem:[#allocation2 + $0xa4] sm:$0xf]
    %v150 = vld [vmem:[#allocation2 + $0xa8] sm:$0xf]
    %v151 = vld [vmem:[#allocation2 + $0xac] sm:$0xf]
    %v152 = vld [vmem:[#allocation2 + $0xb0] sm:$0xf]
    %v153 = vld [vmem:[#allocation2 + $0xb4] sm:$0xf]
    %v154 = vld [vmem:[#allocation2 + $0xb8] sm:$0xf]
    %v155 = vld [vmem:[#allocation2 + $0xbc] sm:$0xf]
    %v156 = vld [vmem:[#allocation2 + $0xc0] sm:$0xf]
    %v157 = vld [vmem:[#allocation2 + $0xc4] sm:$0xf]
    %v158 = vld [vmem:[#allocation2 + $0xc8] sm:$0xf]
    %v159 = vld [vmem:[#allocation2 + $0xcc] sm:$0xf]
    %v160 = vld [vmem:[#allocation2 + $0xd0] sm:$0xf]
    %v161 = vld [vmem:[#allocation2 + $0xd4] sm:$0xf]
    %v162 = vld [vmem:[#allocation2 + $0xd8] sm:$0xf]
    %v163 = vld [vmem:[#allocation2 + $0xdc] sm:$0xf]
    %v164 = vld [vmem:[#allocation2 + $0xe0] sm:$0xf]
    %v165 = vld [vmem:[#allocation2 + $0xe4] sm:$0xf]
    %v166 = vld [vmem:[#allocation2 + $0xe8] sm:$0xf]
    %v167 = vld [vmem:[#allocation2 + $0xec] sm:$0xf]
    %v168 = vld [vmem:[#allocation2 + $0xf0] sm:$0xf]
    %v169 = vld [vmem:[#allocation2 + $0xf4] sm:$0xf]
    %v170 = vld [vmem:[#allocation2 + $0xf8] sm:$0xf]
    %v171 = vld [vmem:[#allocation2 + $0xfc] sm:$0xf]
    %v236 = vunpack.c.l.b16 %v108
    %v237 = vunpack.c.l.b16 %v109
    %v238 = vunpack.c.l.b16 %v110
    %v239 = vunpack.c.l.b16 %v111
    %v240 = vunpack.c.l.b16 %v112
    %v241 = vunpack.c.l.b16 %v113
    %v242 = vunpack.c.l.b16 %v114
    %v243 = vunpack.c.l.b16 %v115
    %v244 = vunpack.c.l.b16 %v116
    %v245 = vunpack.c.l.b16 %v117
    %v246 = vunpack.c.l.b16 %v118
    %v247 = vunpack.c.l.b16 %v119
    %v248 = vunpack.c.l.b16 %v120
    %v249 = vunpack.c.l.b16 %v121
    %v250 = vunpack.c.l.b16 %v122
    %v251 = vunpack.c.l.b16 %v123
    %v252 = vunpack.c.l.b16 %v124
    %v253 = vunpack.c.l.b16 %v125
    %v254 = vunpack.c.l.b16 %v126
    %v255 = vunpack.c.l.b16 %v127
    %v256 = vunpack.c.l.b16 %v128
    %v257 = vunpack.c.l.b16 %v129
    %v258 = vunpack.c.l.b16 %v130
    %v259 = vunpack.c.l.b16 %v131
    %v260 = vunpack.c.l.b16 %v132
    %v261 = vunpack.c.l.b16 %v133
    %v262 = vunpack.c.l.b16 %v134
    %v263 = vunpack.c.l.b16 %v135
    %v264 = vunpack.c.l.b16 %v136
    %v265 = vunpack.c.l.b16 %v137
    %v266 = vunpack.c.l.b16 %v138
    %v267 = vunpack.c.l.b16 %v139
    %v268 = vunpack.c.l.b16 %v140
    %v269 = vunpack.c.l.b16 %v141
    %v270 = vunpack.c.l.b16 %v142
    %v271 = vunpack.c.l.b16 %v143
    %v272 = vunpack.c.l.b16 %v144
    %v273 = vunpack.c.l.b16 %v145
    %v274 = vunpack.c.l.b16 %v146
    %v275 = vunpack.c.l.b16 %v147
    %v276 = vunpack.c.l.b16 %v148
    %v277 = vunpack.c.l.b16 %v149
    %v278 = vunpack.c.l.b16 %v150
    %v279 = vunpack.c.l.b16 %v151
    %v280 = vunpack.c.l.b16 %v152
    %v281 = vunpack.c.l.b16 %v153
    %v282 = vunpack.c.l.b16 %v154
    %v283 = vunpack.c.l.b16 %v155
    %v284 = vunpack.c.l.b16 %v156
    %v285 = vunpack.c.l.b16 %v157
    %v286 = vunpack.c.l.b16 %v158
    %v287 = vunpack.c.l.b16 %v159
    %v288 = vunpack.c.l.b16 %v160
    %v289 = vunpack.c.l.b16 %v161
    %v290 = vunpack.c.l.b16 %v162
    %v291 = vunpack.c.l.b16 %v163
    %v292 = vunpack.c.l.b16 %v164
    %v293 = vunpack.c.l.b16 %v165
    %v294 = vunpack.c.l.b16 %v166
    %v295 = vunpack.c.l.b16 %v167
    %v296 = vunpack.c.l.b16 %v168
    %v297 = vunpack.c.l.b16 %v169
    %v298 = vunpack.c.l.b16 %v170
    %v299 = vunpack.c.l.b16 %v171
    %v300 = vpack.c.b16 %v237, %v236
    %v301 = vpack.c.b16 %v239, %v238
    %v302 = vpack.c.b16 %v241, %v240
    %v303 = vpack.c.b16 %v243, %v242
    %v304 = vpack.c.b16 %v245, %v244
    %v305 = vpack.c.b16 %v247, %v246
    %v306 = vpack.c.b16 %v249, %v248
    %v307 = vpack.c.b16 %v251, %v250
    %v308 = vpack.c.b16 %v253, %v252
    %v309 = vpack.c.b16 %v255, %v254
    %v310 = vpack.c.b16 %v257, %v256
    %v311 = vpack.c.b16 %v259, %v258
    %v312 = vpack.c.b16 %v261, %v260
    %v313 = vpack.c.b16 %v263, %v262
    %v314 = vpack.c.b16 %v265, %v264
    %v315 = vpack.c.b16 %v267, %v266
    %v316 = vpack.c.b16 %v269, %v268
    %v317 = vpack.c.b16 %v271, %v270
    %v318 = vpack.c.b16 %v273, %v272
    %v319 = vpack.c.b16 %v275, %v274
    %v320 = vpack.c.b16 %v277, %v276
    %v321 = vpack.c.b16 %v279, %v278
    %v322 = vpack.c.b16 %v281, %v280
    %v323 = vpack.c.b16 %v283, %v282
    %v324 = vpack.c.b16 %v285, %v284
    %v325 = vpack.c.b16 %v287, %v286
    %v326 = vpack.c.b16 %v289, %v288
    %v327 = vpack.c.b16 %v291, %v290
    %v328 = vpack.c.b16 %v293, %v292
    %v329 = vpack.c.b16 %v295, %v294
    %v330 = vpack.c.b16 %v297, %v296
    %v331 = vpack.c.b16 %v299, %v298
    %364 = vmatpush.bf16.msra.mxu0 %v307
    %365 = vmatpush.bf16.msra.mxu0 %v306
    %366 = vmatpush.bf16.msra.mxu0 %v305
    %367 = vmatpush.bf16.msra.mxu0 %v304
    %368 = vmatpush.bf16.msra.mxu0 %v303
    %369 = vmatpush.bf16.msra.mxu0 %v302
    %370 = vmatpush.bf16.msra.mxu0 %v301
    %371 = vmatpush.bf16.msra.mxu0 %v300
    %372 = vmatmul.bf16.gmra.mxu0 %v104
    %v373 = vpop.f32.mrf.mxu0
    %v374 = vadd.f32 0.0, %v373
    %v375 = vpop.f32.mrf.mxu0
    %376 = vdwg.mxu0
    %377 = vmatpush.bf16.msra.mxu0 %v315
    %378 = vmatpush.bf16.msra.mxu0 %v314
    %379 = vmatpush.bf16.msra.mxu0 %v313
    %380 = vmatpush.bf16.msra.mxu0 %v312
    %381 = vmatpush.bf16.msra.mxu0 %v311
    %382 = vmatpush.bf16.msra.mxu0 %v310
    %383 = vmatpush.bf16.msra.mxu0 %v309
    %384 = vmatpush.bf16.msra.mxu0 %v308
    %385 = vmatmul.bf16.gmra.mxu0 %v105
    %v386 = vpop.f32.mrf.mxu0
    %v387 = vadd.f32 %v374, %v386
    %v388 = vpop.f32.mrf.mxu0
    %389 = vdwg.mxu0
    %390 = vmatpush.bf16.msra.mxu0 %v323
    %391 = vmatpush.bf16.msra.mxu0 %v322
    %392 = vmatpush.bf16.msra.mxu0 %v321
    %393 = vmatpush.bf16.msra.mxu0 %v320
    %394 = vmatpush.bf16.msra.mxu0 %v319
    %395 = vmatpush.bf16.msra.mxu0 %v318
    %396 = vmatpush.bf16.msra.mxu0 %v317
    %397 = vmatpush.bf16.msra.mxu0 %v316
    %398 = vmatmul.bf16.gmra.mxu0 %v106
    %v399 = vpop.f32.mrf.mxu0
    %v400 = vadd.f32 %v387, %v399
    %v401 = vpop.f32.mrf.mxu0
    %402 = vdwg.mxu0
    %403 = vmatpush.bf16.msra.mxu0 %v331
    %404 = vmatpush.bf16.msra.mxu0 %v330
    %405 = vmatpush.bf16.msra.mxu0 %v329
    %406 = vmatpush.bf16.msra.mxu0 %v328
    %407 = vmatpush.bf16.msra.mxu0 %v327
    %408 = vmatpush.bf16.msra.mxu0 %v326
    %409 = vmatpush.bf16.msra.mxu0 %v325
    %410 = vmatpush.bf16.msra.mxu0 %v324
    %411 = vmatmul.bf16.gmra.mxu0 %v107
    %v412 = vpop.f32.mrf.mxu0
    %v413 = vadd.f32 %v400, %v412
    %v414 = vpop.f32.mrf.mxu0
    %415 = vdwg.mxu0
    %v416 = vrot.slane %v413, 4
    %v417 = vadd.f32 %v413, %v416
    %v418 = vrot.slane %v417, 2
    %v419 = vadd.f32 %v417, %v418
    %v420 = vrot.slane %v419, 1
    %v421 = vadd.f32 %v419, %v420
    %v422 = vrcp.pop 8.0
    %v423 = vmul.f32 8.0, %v422
    %v424 = vsub.f32 1.0, %v423
    %v425 = vmul.f32 %v422, %v424
    %v426 = vadd.f32 %v422, %v425
    %vm427 = vweird.f32 %v422
    %v428 = vsel %vm427, %v422, %v426
    %v429 = vmul.f32 %v421, %v428
    %v430 = vmul.f32 %v413, %v413
    %v431 = vrot.slane %v430, 4
    %v432 = vadd.f32 %v430, %v431
    %v433 = vrot.slane %v432, 2
    %v434 = vadd.f32 %v432, %v433
    %v435 = vrot.slane %v434, 1
    %v436 = vadd.f32 %v434, %v435
    %v437 = vmul.f32 %v436, %v428
    %v438 = vmul.f32 %v429, %v429
    %v439 = vsub.f32 %v437, %v438
    %v440 = vld [vmem:[%s3] sm:$0x1]
    %v441 = vadd.f32 %v439, 1e-05
    %v442 = vrsqrt.pop %v441
    %v443 = vmul.f32 %v442, %v441
    %v444 = vmul.f32 %v443, %v442
    %v445 = vmul.f32 0.5, %v444
    %v446 = vsub.f32 1.5, %v445
    %v447 = vmul.f32 %v442, %v446
    %vm448 = vweird.f32 %v441
    %vm449 = vweird.f32 %v442
    %vm450 = vmor %vm448, %vm449
    %v451 = vsel %vm450, %v442, %v447
    %v452 = vmul.f32 %v440, %v451
    %v453 = vld [vmem:[%s4] sm:$0x1]
    %v454 = vmul.f32 %v429, %v452
    %v455 = vsub.f32 %v453, %v454
    %v457 = vperm.slane %v452, 0
    %v459 = vmul.f32 %v413, %v457
    %v461 = vperm.slane %v455, 0
    %v463 = vadd.f32 %v459, %v461
    %v464 = vmax.f32 %v463, 0.0
    %v465 = vpack.c.bf16 %v464, %v464
    %v466 = vld [vmem:[%s5] sm:$0xf]
    %v467 = vld [vmem:[%s5 + $0x4] sm:$0xf]
    %v468 = vld [vmem:[%s5 + $0x8] sm:$0xf]
    %v469 = vld [vmem:[%s5 + $0xc] sm:$0xf]
    %v470 = vld [vmem:[%s5 + $0x10] sm:$0xf]
    %v471 = vld [vmem:[%s5 + $0x14] sm:$0xf]
    %v472 = vld [vmem:[%s5 + $0x18] sm:$0xf]
    %v473 = vld [vmem:[%s5 + $0x1c] sm:$0xf]
    %v474 = vld [vmem:[%s5 + $0x20] sm:$0xf]
    %v475 = vld [vmem:[%s5 + $0x24] sm:$0xf]
    %v476 = vld [vmem:[%s5 + $0x28] sm:$0xf]
    %v477 = vld [vmem:[%s5 + $0x2c] sm:$0xf]
    %v478 = vld [vmem:[%s5 + $0x30] sm:$0xf]
    %v479 = vld [vmem:[%s5 + $0x34] sm:$0xf]
    %v480 = vld [vmem:[%s5 + $0x38] sm:$0xf]
    %v481 = vld [vmem:[%s5 + $0x3c] sm:$0xf]
    %v498 = vunpack.c.l.b16 %v466
    %v499 = vunpack.c.l.b16 %v467
    %v500 = vunpack.c.l.b16 %v468
    %v501 = vunpack.c.l.b16 %v469
    %v502 = vunpack.c.l.b16 %v470
    %v503 = vunpack.c.l.b16 %v471
    %v504 = vunpack.c.l.b16 %v472
    %v505 = vunpack.c.l.b16 %v473
    %v506 = vunpack.c.l.b16 %v474
    %v507 = vunpack.c.l.b16 %v475
    %v508 = vunpack.c.l.b16 %v476
    %v509 = vunpack.c.l.b16 %v477
    %v510 = vunpack.c.l.b16 %v478
    %v511 = vunpack.c.l.b16 %v479
    %v512 = vunpack.c.l.b16 %v480
    %v513 = vunpack.c.l.b16 %v481
    %v514 = vpack.c.b16 %v499, %v498
    %v515 = vpack.c.b16 %v501, %v500
    %v516 = vpack.c.b16 %v503, %v502
    %v517 = vpack.c.b16 %v505, %v504
    %v518 = vpack.c.b16 %v507, %v506
    %v519 = vpack.c.b16 %v509, %v508
    %v520 = vpack.c.b16 %v511, %v510
    %v521 = vpack.c.b16 %v513, %v512
    %530 = vmatpush.bf16.msra.mxu0 %v521
    %531 = vmatpush.bf16.msra.mxu0 %v520
    %532 = vmatpush.bf16.msra.mxu0 %v519
    %533 = vmatpush.bf16.msra.mxu0 %v518
    %534 = vmatpush.bf16.msra.mxu0 %v517
    %535 = vmatpush.bf16.msra.mxu0 %v516
    %536 = vmatpush.bf16.msra.mxu0 %v515
    %537 = vmatpush.bf16.msra.mxu0 %v514
    %538 = vmatmul.bf16.gmra.mxu0 %v465
    %v539 = vpop.f32.mrf.mxu0
    %v540 = vadd.f32 0.0, %v539
    %v541 = vpop.f32.mrf.mxu0
    %542 = vdwg.mxu0
    %vm543 = vcmask 261120
    %v544 = vsel %vm543, %v540, 0.0
    %v545 = vrot.slane %v544, 4
    %v546 = vadd.f32 %v544, %v545
    %v547 = vrot.slane %v546, 2
    %v548 = vadd.f32 %v546, %v547
    %v549 = vrot.slane %v548, 1
    %v550 = vadd.f32 %v548, %v549
    %v551 = vmul.f32 %v550, %v428
    %v552 = vmul.f32 %v540, %v540
    %v553 = vsel %vm543, %v552, 0.0
    %v554 = vrot.slane %v553, 4
    %v555 = vadd.f32 %v553, %v554
    %v556 = vrot.slane %v555, 2
    %v557 = vadd.f32 %v555, %v556
    %v558 = vrot.slane %v557, 1
    %v559 = vadd.f32 %v557, %v558
    %v560 = vmul.f32 %v559, %v428
    %v561 = vmul.f32 %v551, %v551
    %v562 = vsub.f32 %v560, %v561
    %v563 = vld [vmem:[%s6] sm:$0x1]
    %v564 = vadd.f32 %v562, 1e-05
    %v565 = vrsqrt.pop %v564
    %v566 = vmul.f32 %v565, %v564
    %v567 = vmul.f32 %v566, %v565
    %v568 = vmul.f32 0.5, %v567
    %v569 = vsub.f32 1.5, %v568
    %v570 = vmul.f32 %v565, %v569
    %vm571 = vweird.f32 %v564
    %vm572 = vweird.f32 %v565
    %vm573 = vmor %vm571, %vm572
    %v574 = vsel %vm573, %v565, %v570
    %v575 = vmul.f32 %v563, %v574
    %v576 = vld [vmem:[%s7] sm:$0x1]
    %v577 = vmul.f32 %v551, %v575
    %v578 = vsub.f32 %v576, %v577
    %v580 = vperm.slane %v575, 0
    %v582 = vmul.f32 %v540, %v580
    %v584 = vperm.slane %v578, 0
    %v586 = vadd.f32 %v582, %v584
    %v587 = vmax.f32 %v586, 0.0
    %v588 = vpack.c.bf16 %v587, %v587
    %v589 = vld [vmem:[%s8] sm:$0xf]
    %v590 = vld [vmem:[%s8 + $0x4] sm:$0xf]
    %v591 = vld [vmem:[%s8 + $0x8] sm:$0xf]
    %v592 = vld [vmem:[%s8 + $0xc] sm:$0xf]
    %v597 = vunpack.c.l.b16 %v589
    %v598 = vunpack.c.l.b16 %v590
    %v599 = vunpack.c.l.b16 %v591
    %v600 = vunpack.c.l.b16 %v592
    %v601 = vpack.c.b16 %v598, %v597
    %v602 = vpack.c.b16 %v600, %v599
    %v606 = vsel %vm543, %v588, 0
    %608 = vmatpush.bf16.msra.mxu0 0
    %609 = vmatpush.bf16.msra.mxu0 0
    %610 = vmatpush.bf16.msra.mxu0 0
    %611 = vmatpush.bf16.msra.mxu0 0
    %612 = vmatpush.bf16.msra.mxu0 0
    %613 = vmatpush.bf16.msra.mxu0 0
    %614 = vmatpush.bf16.msra.mxu0 %v602
    %615 = vmatpush.bf16.msra.mxu0 %v601
    %616 = vmatmul.bf16.gmra.mxu0 %v606
    %v617 = vpop.f32.mrf.mxu0
    %v618 = vadd.f32 0.0, %v617
    %v619 = vpop.f32.mrf.mxu0
    %620 = vdwg.mxu0
    %vm621 = vcmask 31744
    %v622 = vsel %vm621, %v618, 0.0
    %v623 = vrot.slane %v622, 4
    %v624 = vadd.f32 %v622, %v623
    %v625 = vrot.slane %v624, 2
    %v626 = vadd.f32 %v624, %v625
    %v627 = vrot.slane %v626, 1
    %v628 = vadd.f32 %v626, %v627
    %v629 = vmul.f32 %v628, %v428
    %v630 = vmul.f32 %v618, %v618
    %v631 = vsel %vm621, %v630, 0.0
    %v632 = vrot.slane %v631, 4
    %v633 = vadd.f32 %v631, %v632
    %v634 = vrot.slane %v633, 2
    %v635 = vadd.f32 %v633, %v634
    %v636 = vrot.slane %v635, 1
    %v637 = vadd.f32 %v635, %v636
    %v638 = vmul.f32 %v637, %v428
    %v639 = vmul.f32 %v629, %v629
    %v640 = vsub.f32 %v638, %v639
    %v641 = vld [vmem:[%s9] sm:$0x1]
    %v642 = vadd.f32 %v640, 1e-05
    %v643 = vrsqrt.pop %v642
    %v644 = vmul.f32 %v643, %v642
    %v645 = vmul.f32 %v644, %v643
    %v646 = vmul.f32 0.5, %v645
    %v647 = vsub.f32 1.5, %v646
    %v648 = vmul.f32 %v643, %v647
    %vm649 = vweird.f32 %v642
    %vm650 = vweird.f32 %v643
    %vm651 = vmor %vm649, %vm650
    %v652 = vsel %vm651, %v643, %v648
    %v653 = vmul.f32 %v641, %v652
    %v654 = vld [vmem:[%s10] sm:$0x1]
    %v655 = vmul.f32 %v629, %v653
    %v656 = vsub.f32 %v654, %v655
    %v658 = vperm.slane %v653, 0
    %v660 = vmul.f32 %v618, %v658
    %v662 = vperm.slane %v656, 0
    %v664 = vadd.f32 %v660, %v662
    %v665 = vmul.f32 %v664, 0.5
    %v666 = vmul.f32 %v665, 1.442695
    %v667 = vpow.pop %v666
    %669 = vrot.lane.b32.xlu0 %v667, 126
    %v670 = vpop.permute.xlu0 %669
    %v672 = vmul.f32 %v103, %v670
    %v673 = vadd.f32 %v672, %v664
    %v674 = vld [vmem:[%s11] sm:$0x3]
    %676 = vset.pattern.permute.xlu0 0
    %677 = vperm.xlu0 %676, %v673
    %v678 = vpop.permute.xlu0 %677
    %v680 = vperm.slane %v674, 0
    %v681 = vmul.f32 %v678, %v680
    %682 = vset.pattern.permute.xlu0 1
    %683 = vperm.xlu0 %682, %v673
    %v684 = vpop.permute.xlu0 %683
    %v686 = vperm.slane %v674, 1
    %v687 = vmul.f32 %v684, %v686
    %v688 = vadd.f32 %v681, %v687
    %v689 = vsel %vm543, %v688, 0.0
    %v690 = vrot.slane %v689, 4
    %v691 = vadd.f32 %v689, %v690
    %v692 = vrot.slane %v691, 2
    %v693 = vadd.f32 %v691, %v692
    %v694 = vrot.slane %v693, 1
    %v695 = vadd.f32 %v693, %v694
    %v696 = vmul.f32 %v695, %v428
    %v697 = vmul.f32 %v688, %v688
    %v698 = vsel %vm543, %v697, 0.0
    %v699 = vrot.slane %v698, 4
    %v700 = vadd.f32 %v698, %v699
    %v701 = vrot.slane %v700, 2
    %v702 = vadd.f32 %v700, %v701
    %v703 = vrot.slane %v702, 1
    %v704 = vadd.f32 %v702, %v703
    %v705 = vmul.f32 %v704, %v428
    %v706 = vmul.f32 %v696, %v696
    %v707 = vsub.f32 %v705, %v706
    %v708 = vld [vmem:[%s12] sm:$0x1]
    %v709 = vadd.f32 %v707, 1e-05
    %v710 = vrsqrt.pop %v709
    %v711 = vmul.f32 %v710, %v709
    %v712 = vmul.f32 %v711, %v710
    %v713 = vmul.f32 0.5, %v712
    %v714 = vsub.f32 1.5, %v713
    %v715 = vmul.f32 %v710, %v714
    %vm716 = vweird.f32 %v709
    %vm717 = vweird.f32 %v710
    %vm718 = vmor %vm716, %vm717
    %v719 = vsel %vm718, %v710, %v715
    %v720 = vmul.f32 %v708, %v719
    %v721 = vld [vmem:[%s13] sm:$0x1]
    %v722 = vmul.f32 %v696, %v720
    %v723 = vsub.f32 %v721, %v722
    %v725 = vperm.slane %v720, 0
    %v727 = vmul.f32 %v688, %v725
    %v729 = vperm.slane %v723, 0
    %v731 = vadd.f32 %v727, %v729
    %v732 = vmax.f32 %v731, 0.0
    %v733 = vpack.c.bf16 %v732, %v732
    %v734 = vld [vmem:[%s14] sm:$0xf]
    %v735 = vld [vmem:[%s14 + $0x4] sm:$0xf]
    %v736 = vld [vmem:[%s14 + $0x8] sm:$0xf]
    %v737 = vld [vmem:[%s14 + $0xc] sm:$0xf]
    %v742 = vunpack.c.l.b16 %v734
    %v743 = vunpack.c.l.b16 %v735
    %v744 = vunpack.c.l.b16 %v736
    %v745 = vunpack.c.l.b16 %v737
    %v746 = vpack.c.b16 %v743, %v742
    %v747 = vpack.c.b16 %v745, %v744
    %v751 = vsel %vm543, %v733, 0
    %753 = vmatpush.bf16.msra.mxu0 0
    %754 = vmatpush.bf16.msra.mxu0 0
    %755 = vmatpush.bf16.msra.mxu0 0
    %756 = vmatpush.bf16.msra.mxu0 0
    %757 = vmatpush.bf16.msra.mxu0 0
    %758 = vmatpush.bf16.msra.mxu0 0
    %759 = vmatpush.bf16.msra.mxu0 %v747
    %760 = vmatpush.bf16.msra.mxu0 %v746
    %761 = vmatmul.bf16.gmra.mxu0 %v751
    %v762 = vpop.f32.mrf.mxu0
    %v763 = vadd.f32 0.0, %v762
    %v764 = vpop.f32.mrf.mxu0
    %765 = vdwg.mxu0
    %v766 = vrot.slane %v763, 4
    %v767 = vadd.f32 %v763, %v766
    %v768 = vrot.slane %v767, 2
    %v769 = vadd.f32 %v767, %v768
    %v770 = vrot.slane %v769, 1
    %v771 = vadd.f32 %v769, %v770
    %v772 = vmul.f32 %v771, %v428
    %v773 = vmul.f32 %v763, %v763
    %v774 = vrot.slane %v773, 4
    %v775 = vadd.f32 %v773, %v774
    %v776 = vrot.slane %v775, 2
    %v777 = vadd.f32 %v775, %v776
    %v778 = vrot.slane %v777, 1
    %v779 = vadd.f32 %v777, %v778
    %v780 = vmul.f32 %v779, %v428
    %v781 = vmul.f32 %v772, %v772
    %v782 = vsub.f32 %v780, %v781
    %v783 = vld [vmem:[%s15] sm:$0x1]
    %v784 = vadd.f32 %v782, 1e-05
    %v785 = vrsqrt.pop %v784
    %v786 = vmul.f32 %v785, %v784
    %v787 = vmul.f32 %v786, %v785
    %v788 = vmul.f32 0.5, %v787
    %v789 = vsub.f32 1.5, %v788
    %v790 = vmul.f32 %v785, %v789
    %vm791 = vweird.f32 %v784
    %vm792 = vweird.f32 %v785
    %vm793 = vmor %vm791, %vm792
    %v794 = vsel %vm793, %v785, %v790
    %v795 = vmul.f32 %v783, %v794
    %v796 = vld [vmem:[%s16] sm:$0x1]
    %v797 = vmul.f32 %v772, %v795
    %v798 = vsub.f32 %v796, %v797
    %v800 = vperm.slane %v795, 0
    %v802 = vmul.f32 %v763, %v800
    %v804 = vperm.slane %v798, 0
    %v806 = vadd.f32 %v802, %v804
    %v807 = vmax.f32 %v806, 0.0
    %v808 = vpack.c.bf16 %v807, %v807
    %v809 = vld [vmem:[#allocation5] sm:$0xff]
    %v810 = vld [vmem:[#allocation5 + $0x8] sm:$0xff]
    %v811 = vld [vmem:[#allocation5 + $0x10] sm:$0xff]
    %v812 = vld [vmem:[#allocation5 + $0x18] sm:$0xff]
    %v813 = vld [vmem:[#allocation5 + $0x20] sm:$0xff]
    %v814 = vld [vmem:[#allocation5 + $0x28] sm:$0xff]
    %v815 = vld [vmem:[#allocation5 + $0x30] sm:$0xff]
    %v816 = vld [vmem:[#allocation5 + $0x38] sm:$0xff]
    %v817 = vld [vmem:[#allocation5 + $0x40] sm:$0xff]
    %v818 = vld [vmem:[#allocation5 + $0x48] sm:$0xff]
    %v819 = vld [vmem:[#allocation5 + $0x50] sm:$0xff]
    %v820 = vld [vmem:[#allocation5 + $0x58] sm:$0xff]
    %v821 = vld [vmem:[#allocation5 + $0x60] sm:$0xff]
    %v822 = vld [vmem:[#allocation5 + $0x68] sm:$0xff]
    %v823 = vld [vmem:[#allocation5 + $0x70] sm:$0xff]
    %v824 = vld [vmem:[#allocation5 + $0x78] sm:$0xff]
    %v825 = vld [vmem:[#allocation5 + $0x80] sm:$0xff]
    %v826 = vld [vmem:[#allocation5 + $0x88] sm:$0xff]
    %v827 = vld [vmem:[#allocation5 + $0x90] sm:$0xff]
    %v828 = vld [vmem:[#allocation5 + $0x98] sm:$0xff]
    %v829 = vld [vmem:[#allocation5 + $0xa0] sm:$0xff]
    %v830 = vld [vmem:[#allocation5 + $0xa8] sm:$0xff]
    %v831 = vld [vmem:[#allocation5 + $0xb0] sm:$0xff]
    %v832 = vld [vmem:[#allocation5 + $0xb8] sm:$0xff]
    %v833 = vld [vmem:[#allocation5 + $0xc0] sm:$0xff]
    %v834 = vld [vmem:[#allocation5 + $0xc8] sm:$0xff]
    %v835 = vld [vmem:[#allocation5 + $0xd0] sm:$0xff]
    %v836 = vld [vmem:[#allocation5 + $0xd8] sm:$0xff]
    %v837 = vld [vmem:[#allocation5 + $0xe0] sm:$0xff]
    %v838 = vld [vmem:[#allocation5 + $0xe8] sm:$0xff]
    %v839 = vld [vmem:[#allocation5 + $0xf0] sm:$0xff]
    %v840 = vld [vmem:[#allocation5 + $0xf8] sm:$0xff]
    %v841 = vld [vmem:[%s18] sm:$0xf]
    %v843 = vperm.slane %v841, 0
    %v844 = vperm.slane %v841, 1
    %v845 = vperm.slane %v841, 2
    %v846 = vperm.slane %v841, 3
    %v883 = vunpack.c.l.b16 %v809
    %v884 = vunpack.c.h.b16 %v809
    %v885 = vunpack.c.l.b16 %v810
    %v886 = vunpack.c.h.b16 %v810
    %v887 = vunpack.c.l.b16 %v811
    %v888 = vunpack.c.h.b16 %v811
    %v889 = vunpack.c.l.b16 %v812
    %v890 = vunpack.c.h.b16 %v812
    %v891 = vunpack.c.l.b16 %v813
    %v892 = vunpack.c.h.b16 %v813
    %v893 = vunpack.c.l.b16 %v814
    %v894 = vunpack.c.h.b16 %v814
    %v895 = vunpack.c.l.b16 %v815
    %v896 = vunpack.c.h.b16 %v815
    %v897 = vunpack.c.l.b16 %v816
    %v898 = vunpack.c.h.b16 %v816
    %v899 = vunpack.c.l.b16 %v817
    %v900 = vunpack.c.h.b16 %v817
    %v901 = vunpack.c.l.b16 %v818
    %v902 = vunpack.c.h.b16 %v818
    %v903 = vunpack.c.l.b16 %v819
    %v904 = vunpack.c.h.b16 %v819
    %v905 = vunpack.c.l.b16 %v820
    %v906 = vunpack.c.h.b16 %v820
    %v907 = vunpack.c.l.b16 %v821
    %v908 = vunpack.c.h.b16 %v821
    %v909 = vunpack.c.l.b16 %v822
    %v910 = vunpack.c.h.b16 %v822
    %v911 = vunpack.c.l.b16 %v823
    %v912 = vunpack.c.h.b16 %v823
    %v913 = vunpack.c.l.b16 %v824
    %v914 = vunpack.c.h.b16 %v824
    %v915 = vunpack.c.l.b16 %v825
    %v916 = vunpack.c.h.b16 %v825
    %v917 = vunpack.c.l.b16 %v826
    %v918 = vunpack.c.h.b16 %v826
    %v919 = vunpack.c.l.b16 %v827
    %v920 = vunpack.c.h.b16 %v827
    %v921 = vunpack.c.l.b16 %v828
    %v922 = vunpack.c.h.b16 %v828
    %v923 = vunpack.c.l.b16 %v829
    %v924 = vunpack.c.h.b16 %v829
    %v925 = vunpack.c.l.b16 %v830
    %v926 = vunpack.c.h.b16 %v830
    %v927 = vunpack.c.l.b16 %v831
    %v928 = vunpack.c.h.b16 %v831
    %v929 = vunpack.c.l.b16 %v832
    %v930 = vunpack.c.h.b16 %v832
    %v931 = vunpack.c.l.b16 %v833
    %v932 = vunpack.c.h.b16 %v833
    %v933 = vunpack.c.l.b16 %v834
    %v934 = vunpack.c.h.b16 %v834
    %v935 = vunpack.c.l.b16 %v835
    %v936 = vunpack.c.h.b16 %v835
    %v937 = vunpack.c.l.b16 %v836
    %v938 = vunpack.c.h.b16 %v836
    %v939 = vunpack.c.l.b16 %v837
    %v940 = vunpack.c.h.b16 %v837
    %v941 = vunpack.c.l.b16 %v838
    %v942 = vunpack.c.h.b16 %v838
    %v943 = vunpack.c.l.b16 %v839
    %v944 = vunpack.c.h.b16 %v839
    %v945 = vunpack.c.l.b16 %v840
    %v946 = vunpack.c.h.b16 %v840
    %v947 = vpack.c.b16 %v887, %v883
    %v948 = vpack.c.b16 %v888, %v884
    %v949 = vpack.c.b16 %v889, %v885
    %v950 = vpack.c.b16 %v890, %v886
    %v951 = vpack.c.b16 %v895, %v891
    %v952 = vpack.c.b16 %v896, %v892
    %v953 = vpack.c.b16 %v897, %v893
    %v954 = vpack.c.b16 %v898, %v894
    %v955 = vpack.c.b16 %v903, %v899
    %v956 = vpack.c.b16 %v904, %v900
    %v957 = vpack.c.b16 %v905, %v901
    %v958 = vpack.c.b16 %v906, %v902
    %v959 = vpack.c.b16 %v911, %v907
    %v960 = vpack.c.b16 %v912, %v908
    %v961 = vpack.c.b16 %v913, %v909
    %v962 = vpack.c.b16 %v914, %v910
    %v963 = vpack.c.b16 %v919, %v915
    %v964 = vpack.c.b16 %v920, %v916
    %v965 = vpack.c.b16 %v921, %v917
    %v966 = vpack.c.b16 %v922, %v918
    %v967 = vpack.c.b16 %v927, %v923
    %v968 = vpack.c.b16 %v928, %v924
    %v969 = vpack.c.b16 %v929, %v925
    %v970 = vpack.c.b16 %v930, %v926
    %v971 = vpack.c.b16 %v935, %v931
    %v972 = vpack.c.b16 %v936, %v932
    %v973 = vpack.c.b16 %v937, %v933
    %v974 = vpack.c.b16 %v938, %v934
    %v975 = vpack.c.b16 %v943, %v939
    %v976 = vpack.c.b16 %v944, %v940
    %v977 = vpack.c.b16 %v945, %v941
    %v978 = vpack.c.b16 %v946, %v942
    %1011 = vmatpush.bf16.msra.mxu0 %v975
    %1012 = vmatpush.bf16.msra.mxu0 %v971
    %1013 = vmatpush.bf16.msra.mxu0 %v967
    %1014 = vmatpush.bf16.msra.mxu0 %v963
    %1015 = vmatpush.bf16.msra.mxu0 %v959
    %1016 = vmatpush.bf16.msra.mxu0 %v955
    %1017 = vmatpush.bf16.msra.mxu0 %v951
    %1018 = vmatpush.bf16.msra.mxu0 %v947
    %1019 = vmatmul.bf16.gmra.mxu0 %v808
    %v1020 = vpop.f32.mrf.mxu0
    %v1021 = vadd.f32 %v843, %v1020
    %v1022 = vpop.f32.mrf.mxu0
    %1023 = vdwg.mxu0
    %1024 = vmatpush.bf16.msra.mxu0 %v976
    %1025 = vmatpush.bf16.msra.mxu0 %v972
    %1026 = vmatpush.bf16.msra.mxu0 %v968
    %1027 = vmatpush.bf16.msra.mxu0 %v964
    %1028 = vmatpush.bf16.msra.mxu0 %v960
    %1029 = vmatpush.bf16.msra.mxu0 %v956
    %1030 = vmatpush.bf16.msra.mxu0 %v952
    %1031 = vmatpush.bf16.msra.mxu0 %v948
    %1032 = vmatmul.bf16.gmra.mxu0 %v808
    %v1033 = vpop.f32.mrf.mxu0
    %v1034 = vadd.f32 %v844, %v1033
    %v1035 = vpop.f32.mrf.mxu0
    %1036 = vdwg.mxu0
    %1037 = vmatpush.bf16.msra.mxu0 %v977
    %1038 = vmatpush.bf16.msra.mxu0 %v973
    %1039 = vmatpush.bf16.msra.mxu0 %v969
    %1040 = vmatpush.bf16.msra.mxu0 %v965
    %1041 = vmatpush.bf16.msra.mxu0 %v961
    %1042 = vmatpush.bf16.msra.mxu0 %v957
    %1043 = vmatpush.bf16.msra.mxu0 %v953
    %1044 = vmatpush.bf16.msra.mxu0 %v949
    %1045 = vmatmul.bf16.gmra.mxu0 %v808
    %v1046 = vpop.f32.mrf.mxu0
    %v1047 = vadd.f32 %v845, %v1046
    %v1048 = vpop.f32.mrf.mxu0
    %1049 = vdwg.mxu0
    %1050 = vmatpush.bf16.msra.mxu0 %v978
    %1051 = vmatpush.bf16.msra.mxu0 %v974
    %1052 = vmatpush.bf16.msra.mxu0 %v970
    %1053 = vmatpush.bf16.msra.mxu0 %v966
    %1054 = vmatpush.bf16.msra.mxu0 %v962
    %1055 = vmatpush.bf16.msra.mxu0 %v958
    %1056 = vmatpush.bf16.msra.mxu0 %v954
    %1057 = vmatpush.bf16.msra.mxu0 %v950
    %1058 = vmatmul.bf16.gmra.mxu0 %v808
    %v1059 = vpop.f32.mrf.mxu0
    %v1060 = vadd.f32 %v846, %v1059
    %v1061 = vpop.f32.mrf.mxu0
    %1062 = vdwg.mxu0
    %v1063 = vxor.u32 %v1021, 2147483648
    %v1064 = vxor.u32 %v1034, 2147483648
    %v1065 = vxor.u32 %v1047, 2147483648
    %v1066 = vxor.u32 %v1060, 2147483648
    %v1067 = vmul.f32 %v1063, 1.442695
    %v1068 = vpow.pop %v1067
    %v1069 = vmul.f32 %v1064, 1.442695
    %v1070 = vpow.pop %v1069
    %v1071 = vmul.f32 %v1065, 1.442695
    %v1072 = vpow.pop %v1071
    %v1073 = vmul.f32 %v1066, 1.442695
    %v1074 = vpow.pop %v1073
    %v1075 = vadd.f32 %v1068, 1.0
    %v1076 = vadd.f32 %v1070, 1.0
    %v1077 = vadd.f32 %v1072, 1.0
    %v1078 = vadd.f32 %v1074, 1.0
    %v1079 = vrcp.pop %v1075
    %v1080 = vmul.f32 %v1075, %v1079
    %v1081 = vsub.f32 1.0, %v1080
    %v1082 = vmul.f32 %v1079, %v1081
    %v1083 = vadd.f32 %v1079, %v1082
    %vm1084 = vweird.f32 %v1075
    %vm1085 = vweird.f32 %v1079
    %vm1086 = vmor %vm1084, %vm1085
    %v1087 = vsel %vm1086, %v1079, %v1083
    %v1088 = vand.u32 2147483647, %v1075
    %vm1089 = vcmp.eq.f32.partialorder %v1088, 8.507059e+37
    %v1090 = vand.u32 %v1075, 2147483648
    %v1091 = vor.u32 1.1754944e-38, %v1090
    %v1092 = vsel %vm1089, %v1091, %v1087
    %v1093 = vmul.f32 1.0, %v1092
    %v1094 = vrcp.pop %v1076
    %v1095 = vmul.f32 %v1076, %v1094
    %v1096 = vsub.f32 1.0, %v1095
    %v1097 = vmul.f32 %v1094, %v1096
    %v1098 = vadd.f32 %v1094, %v1097
    %vm1099 = vweird.f32 %v1076
    %vm1100 = vweird.f32 %v1094
    %vm1101 = vmor %vm1099, %vm1100
    %v1102 = vsel %vm1101, %v1094, %v1098
    %v1103 = vand.u32 2147483647, %v1076
    %vm1104 = vcmp.eq.f32.partialorder %v1103, 8.507059e+37
    %v1105 = vand.u32 %v1076, 2147483648
    %v1106 = vor.u32 1.1754944e-38, %v1105
    %v1107 = vsel %vm1104, %v1106, %v1102
    %v1108 = vmul.f32 1.0, %v1107
    %v1109 = vrcp.pop %v1077
    %v1110 = vmul.f32 %v1077, %v1109
    %v1111 = vsub.f32 1.0, %v1110
    %v1112 = vmul.f32 %v1109, %v1111
    %v1113 = vadd.f32 %v1109, %v1112
    %vm1114 = vweird.f32 %v1077
    %vm1115 = vweird.f32 %v1109
    %vm1116 = vmor %vm1114, %vm1115
    %v1117 = vsel %vm1116, %v1109, %v1113
    %v1118 = vand.u32 2147483647, %v1077
    %vm1119 = vcmp.eq.f32.partialorder %v1118, 8.507059e+37
    %v1120 = vand.u32 %v1077, 2147483648
    %v1121 = vor.u32 1.1754944e-38, %v1120
    %v1122 = vsel %vm1119, %v1121, %v1117
    %v1123 = vmul.f32 1.0, %v1122
    %v1124 = vrcp.pop %v1078
    %v1125 = vmul.f32 %v1078, %v1124
    %v1126 = vsub.f32 1.0, %v1125
    %v1127 = vmul.f32 %v1124, %v1126
    %v1128 = vadd.f32 %v1124, %v1127
    %vm1129 = vweird.f32 %v1078
    %vm1130 = vweird.f32 %v1124
    %vm1131 = vmor %vm1129, %vm1130
    %v1132 = vsel %vm1131, %v1124, %v1128
    %v1133 = vand.u32 2147483647, %v1078
    %vm1134 = vcmp.eq.f32.partialorder %v1133, 8.507059e+37
    %v1135 = vand.u32 %v1078, 2147483648
    %v1136 = vor.u32 1.1754944e-38, %v1135
    %v1137 = vsel %vm1134, %v1136, %v1132
    %v1138 = vmul.f32 1.0, %v1137
    %1139 = vst [vmem:[#allocation7] sm:$0xff] %v1093
    %1140 = vst [vmem:[#allocation7 + $0x8] sm:$0xff] %v1108
    %1141 = vst [vmem:[#allocation7 + $0x10] sm:$0xff] %v1123
    %1142 = vst [vmem:[#allocation7 + $0x18] sm:$0xff] %v1138
    %1143 = vrot.lane.b32.xlu0 %v673, 4
    %v1144 = vpop.permute.xlu0 %1143
    %v1146 = vsel %vm621, %v664, %v1144
    %vm1147 = vcmask 48128
    %1148 = vst.msk [vmem:[#allocation8] sm:$0xff] %vm1147, %v1146
    // Predicated region
    $region86: #{tpu_custom_call.1} parent=1 // pred_check
      _
    $region87: #{tpu_custom_call.1} parent=1 // pred_check_branch
      %1150 = sbr.rel (0) target = $region89
    $region88: #{tpu_custom_call.1} parent=1 // pred_region
      %1152 = vsyncadd [#allocation4], 0
      %s1154 = sshll.u32 [#allocation7], 4
      %s1155 = int_to_ptr.vmem [resolvable:$true] %s1154
      %s1156 = sshll.u32 %s19, 4
      %s1157 = int_to_ptr.hbm [resolvable:$true] %s1156
      %1159 = dma.vmem_to_hbm [thread:$0]  %s1155, 512, %s1157, [#allocation4]
    $region89: #{tpu_custom_call.1} parent=1 // pred_fallthru
      _
    // Predicated region
    $region90: #{tpu_custom_call.1} parent=1 // pred_check
      _
    $region91: #{tpu_custom_call.1} parent=1 // pred_check_branch
      %1161 = sbr.rel (0) target = $region93
    $region92: #{tpu_custom_call.1} parent=1 // pred_region
      %1163 = vsyncadd [#allocation9], 0
      %s1165 = sshll.u32 [#allocation8], 4
      %s1166 = int_to_ptr.vmem [resolvable:$true] %s1165
      %s1167 = sshll.u32 %s20, 4
      %s1168 = int_to_ptr.hbm [resolvable:$true] %s1167
      %1170 = dma.vmem_to_hbm [thread:$0]  %s1166, 128, %s1168, [#allocation9]
    $region93: #{tpu_custom_call.1} parent=1 // pred_fallthru
      _
    // Predicated region
    $region94: #{tpu_custom_call.1} parent=1 // pred_check
      _
    $region95: #{tpu_custom_call.1} parent=1 // pred_check_branch
      %1172 = sbr.rel (0) target = $region97
    $region96: #{tpu_custom_call.1} parent=1 // pred_region
      %1174 = dma.done [#allocation4], 512
    $region97: #{tpu_custom_call.1} parent=1 // pred_fallthru
      _
    // Predicated region
    $region98: #{tpu_custom_call.1} parent=1 // pred_check
      _
    $region99: #{tpu_custom_call.1} parent=1 // pred_check_branch
      %1176 = sbr.rel (0) target = $region101
    $region100: #{tpu_custom_call.1} parent=1 // pred_region
      %1178 = dma.done [#allocation9], 128
    $region101: #{tpu_custom_call.1} parent=1 // pred_fallthru
      _
    %1179 = vsyncpa [#allocation3], 1
    %1180 = vsyncpa [#allocation6], 1
    %1181 = vsyncpa [#allocation4], 1
    %1182 = vsyncpa [#allocation9], 1

</llo_original>
